<compile_context>
chip_gen: v6e
topology: v6e:2x2x1
jax: 0.10.0
libtpu: 0.0.40
codegen_flags: <defaults>
</compile_context>

<pallas_src>
import functools

import jax
import jax.numpy as jnp
from jax.experimental import pallas as pl
from jax.experimental.pallas import tpu as pltpu


def _lstm_kernel(x_ref, wih_ref, whh_ref, b_ref, wlin_ref, blin_ref, pred_ref,
                 *, hidden, seq_len):
    """One batch-tile of independent sequences.

    x_ref    : (Bt, S)      input values (input_size == 1: one scalar per timestep)
    wih_ref  : (1, 4H)      W_ih^T row (input_size == 1)
    whh_ref  : (H, 4H)      W_hh^T
    b_ref    : (1, 4H)      b_ih + b_hh
    wlin_ref : (1, H)       Linear weight (output_size == 1)
    blin_ref : (1, 1)       Linear bias
    pred_ref : (Bt, 1)      predictions[-1] per sequence
    """
    H = hidden
    Bt = x_ref.shape[0]

    x_all = x_ref[...]                                     # (Bt, S) — one narrow load, reused
    whh_t = whh_ref[...]                                   # (H, 4H)
    # Hoist invariant broadcasts out of the unrolled loop (no CSE of broadcast_in_dim).
    wih_b = jnp.broadcast_to(wih_ref[...], (Bt, 4 * H))    # (Bt, 4H)
    bias_b = jnp.broadcast_to(b_ref[...], (Bt, 4 * H))     # (Bt, 4H)

    h = jnp.zeros((Bt, H), jnp.float32)
    c = jnp.zeros((Bt, H), jnp.float32)

    # Sequential recurrence; seq_len is small & static -> unrolled at trace time.
    for t in range(seq_len):
        x_t = x_all[:, t:t + 1]                            # (Bt, 1), lane-broadcast below
        # Input projection with K=1 is a VPU broadcast multiply-add (no MXU push);
        # only the recurrent term is a real (Bt,H)@(H,4H) MXU matmul.
        gates = (x_t * wih_b + bias_b
                 + jnp.dot(h, whh_t, preferred_element_type=jnp.float32))   # (Bt, 4H)

        # Two full-width transcendental pushes instead of four quadrant-sliced ones;
        # quadrant slices afterwards lower to XLU lane work (idle unit here).
        sig = jax.nn.sigmoid(gates)                        # (Bt, 4H)
        th = jnp.tanh(gates)                               # (Bt, 4H)
        i_g = sig[:, 0 * H:1 * H]
        f_g = sig[:, 1 * H:2 * H]
        g_g = th[:, 2 * H:3 * H]
        o_g = sig[:, 3 * H:4 * H]

        c = f_g * c + i_g * g_g
        h = o_g * jnp.tanh(c)

    # Final Linear (output_size == 1): VPU multiply + cross-lane reduce instead of a
    # degenerate (Bt,H)@(H,1) MXU dot.
    pred_ref[...] = (jnp.sum(h * wlin_ref[...], axis=-1, keepdims=True)
                     + blin_ref[...])


def prepare_params(params, *, hidden, output_size):
    """One-time parameter prep (transposes / bias sum hoisted out of the hot path)."""
    w_ih, w_hh, b_ih, b_hh, w_lin, b_lin = params
    wih_row = jnp.transpose(w_ih).reshape(1, 4 * hidden)   # (1, 4H)   (input_size == 1)
    whh_t = jnp.transpose(w_hh)                            # (H, 4H)
    b = (b_ih + b_hh).reshape(1, 4 * hidden)               # (1, 4H)
    wlin = w_lin.reshape(output_size, hidden)              # (1, H)
    blin = b_lin.reshape(1, output_size)                   # (1, 1)
    return (wih_row, whh_t, b, wlin, blin)


@functools.partial(jax.jit, static_argnames=("hidden", "output_size", "block_b"))
def lstm_forward_batched(input_seqs, prepared, *, hidden, output_size, block_b=8):
    """Run B independent module-forward passes (each returns predictions[-1]).

    input_seqs: (B, S) float32 (input_size == 1).  Returns (B, output_size).
    """
    assert output_size == 1, "kernel's reduce-based output head assumes output_size == 1"
    B, S = int(input_seqs.shape[0]), int(input_seqs.shape[1])
    wih_row, whh_t, b, wlin, blin = prepared

    x = input_seqs.astype(jnp.float32)
    Bp = ((B + block_b - 1) // block_b) * block_b          # pad batch to sublane multiple
    if Bp != B:
        x = jnp.pad(x, ((0, Bp - B), (0, 0)))

    pred = pl.pallas_call(
        functools.partial(_lstm_kernel, hidden=hidden, seq_len=S),
        out_shape=jax.ShapeDtypeStruct((Bp, output_size), jnp.float32),
        grid=(Bp // block_b,),
        in_specs=[
            pl.BlockSpec((block_b, S), lambda i: (i, 0)),            # x  (batch-tiled)
            pl.BlockSpec((1, 4 * hidden), lambda i: (0, 0)),         # W_ih^T row
            pl.BlockSpec((hidden, 4 * hidden), lambda i: (0, 0)),    # W_hh^T
            pl.BlockSpec((1, 4 * hidden), lambda i: (0, 0)),         # bias (b_ih + b_hh)
            pl.BlockSpec((output_size, hidden), lambda i: (0, 0)),   # Linear weight
            pl.BlockSpec((1, output_size), lambda i: (0, 0)),        # Linear bias
        ],
        out_specs=pl.BlockSpec((block_b, output_size), lambda i: (i, 0)),
        compiler_params=pltpu.CompilerParams(
            dimension_semantics=("parallel",)),                      # shard batch tiles over TCs
    )(x, wih_row, whh_t, b, wlin, blin)
    return pred[:B]


def lstm_forward(input_seq, prepared, *, hidden, output_size):
    """Exact semantics of LSTM.forward: single sequence -> predictions[-1], (output_size,)."""
    x = input_seq.reshape(1, -1).astype(jnp.float32)        # (1, S), input_size == 1
    pred = lstm_forward_batched(x, prepared, hidden=hidden, output_size=output_size)
    return pred.reshape(output_size)


def _jax_reference(input_seq, params, *, hidden, output_size):
    seq_len = int(input_seq.shape[0])
    x = input_seq.reshape(seq_len, -1).astype(jnp.float32)
    w_ih, w_hh, b_ih, b_hh, w_lin, b_lin = params
    H = hidden
    h = jnp.zeros((1, H), jnp.float32)
    c = jnp.zeros((1, H), jnp.float32)
    for t in range(seq_len):
        gates = x[t:t + 1] @ w_ih.T + b_ih + h @ w_hh.T + b_hh
        i_g = jax.nn.sigmoid(gates[:, 0 * H:1 * H])
        f_g = jax.nn.sigmoid(gates[:, 1 * H:2 * H])
        g_g = jnp.tanh(gates[:, 2 * H:3 * H])
        o_g = jax.nn.sigmoid(gates[:, 3 * H:4 * H])
        c = f_g * c + i_g * g_g
        h = o_g * jnp.tanh(c)
    return (h @ w_lin.T + b_lin).reshape(output_size)


def init_params(key, *, input_size, hidden, output_size):
    # PyTorch default init: U(-1/sqrt(H), 1/sqrt(H)) for LSTM and Linear params.
    k = 1.0 / jnp.sqrt(jnp.float32(hidden))
    ks = jax.random.split(key, 6)
    u = lambda kk, shape: jax.random.uniform(kk, shape, jnp.float32, -k, k)
    w_ih = u(ks[0], (4 * hidden, input_size))
    w_hh = u(ks[1], (4 * hidden, hidden))
    b_ih = u(ks[2], (4 * hidden,))
    b_hh = u(ks[3], (4 * hidden,))
    w_lin = u(ks[4], (output_size, hidden))
    b_lin = u(ks[5], (output_size,))
    return (w_ih, w_hh, b_ih, b_hh, w_lin, b_lin)


if __name__ == "__main__":
    INPUT_SIZE = 1
    HIDDEN = 32          # 4*H = 128 -> lane-aligned gate dimension
    OUTPUT_SIZE = 1
    SEQ = 8
    BATCH = 8            # independent sequences evaluated in one kernel call

    key = jax.random.PRNGKey(0)
    pkey, xkey = jax.random.split(key)
    params = init_params(pkey, input_size=INPUT_SIZE, hidden=HIDDEN,
                         output_size=OUTPUT_SIZE)
    prepared = prepare_params(params, hidden=HIDDEN, output_size=OUTPUT_SIZE)

    input_seqs = jax.random.normal(xkey, (BATCH, SEQ), jnp.float32)

    # Batched path: BATCH independent module-forward passes in one pallas_call.
    preds = lstm_forward_batched(input_seqs, prepared, hidden=HIDDEN,
                                 output_size=OUTPUT_SIZE)
    preds = jax.block_until_ready(preds)
    assert preds.shape == (BATCH, OUTPUT_SIZE)

    refs = jnp.stack([_jax_reference(input_seqs[b], params, hidden=HIDDEN,
                                     output_size=OUTPUT_SIZE)
                      for b in range(BATCH)])
    assert jnp.allclose(preds, refs, atol=1e-5, rtol=1e-5), (preds, refs)

    # Single-sequence path (exact semantics of LSTM.forward -> predictions[-1]).
    out = lstm_forward(input_seqs[0], prepared, hidden=HIDDEN,
                       output_size=OUTPUT_SIZE)
    out = jax.block_until_ready(out)
    assert out.shape == (OUTPUT_SIZE,)
    assert jnp.allclose(out, refs[0], atol=1e-5, rtol=1e-5), (out, refs[0])

    print("KERNEL_OK")
</pallas_src>

<mosaic_0001>
module attributes {stable_mosaic.version = 11 : i64} {
  func.func @_lstm_kernel(%arg0: i32, %arg1: memref<8x8xf32, #tpu.memory_space<vmem>>, %arg2: memref<1x128xf32, #tpu.memory_space<vmem>>, %arg3: memref<32x128xf32, #tpu.memory_space<vmem>>, %arg4: memref<1x128xf32, #tpu.memory_space<vmem>>, %arg5: memref<1x32xf32, #tpu.memory_space<vmem>>, %arg6: memref<1x1xf32, #tpu.memory_space<vmem>>, %arg7: memref<8x1xf32, #tpu.memory_space<vmem>>) attributes {dimension_semantics = [#tpu.dimension_semantics<parallel>], iteration_bounds = array<i64: 1>, scalar_prefetch = 0 : i64, scratch_operands = 0 : i64, tpu.core_type = #tpu.core_type<tc>, window_params = [{transform_indices = @transform_0, window_bounds = array<i64: 8, 8>}, {pipeline_mode = #tpu.pipeline_mode<synchronous>, transform_indices = @transform_1, window_bounds = array<i64: 1, 128>}, {pipeline_mode = #tpu.pipeline_mode<synchronous>, transform_indices = @transform_2, window_bounds = array<i64: 32, 128>}, {pipeline_mode = #tpu.pipeline_mode<synchronous>, transform_indices = @transform_3, window_bounds = array<i64: 1, 128>}, {pipeline_mode = #tpu.pipeline_mode<synchronous>, transform_indices = @transform_4, window_bounds = array<i64: 1, 32>}, {pipeline_mode = #tpu.pipeline_mode<synchronous>, transform_indices = @transform_5, window_bounds = array<i64: 1, 1>}, {transform_indices = @transform_6, window_bounds = array<i64: 8, 1>}]} {
    %c0 = arith.constant 0 : index
    %c0_0 = arith.constant 0 : index
    %0 = vector.load %arg1[%c0, %c0_0] : memref<8x8xf32, #tpu.memory_space<vmem>>, vector<8x8xf32>
    %c0_1 = arith.constant 0 : index
    %c0_2 = arith.constant 0 : index
    %1 = vector.load %arg3[%c0_1, %c0_2] : memref<32x128xf32, #tpu.memory_space<vmem>>, vector<32x128xf32>
    %c0_3 = arith.constant 0 : index
    %c0_4 = arith.constant 0 : index
    %2 = vector.load %arg2[%c0_3, %c0_4] : memref<1x128xf32, #tpu.memory_space<vmem>>, vector<1x128xf32>
    %3 = vector.shape_cast %2 : vector<1x128xf32> to vector<1x128xf32>
    %4 = vector.broadcast %3 : vector<1x128xf32> to vector<8x128xf32>
    %c0_5 = arith.constant 0 : index
    %c0_6 = arith.constant 0 : index
    %5 = vector.load %arg4[%c0_5, %c0_6] : memref<1x128xf32, #tpu.memory_space<vmem>>, vector<1x128xf32>
    %6 = vector.shape_cast %5 : vector<1x128xf32> to vector<1x128xf32>
    %7 = vector.broadcast %6 : vector<1x128xf32> to vector<8x128xf32>
    %cst = arith.constant 0.000000e+00 : f32
    %8 = vector.broadcast %cst : f32 to vector<8x32xf32>
    %cst_7 = arith.constant 0.000000e+00 : f32
    %9 = vector.broadcast %cst_7 : f32 to vector<8x32xf32>
    %10 = vector.extract_strided_slice %0 {offsets = [0, 0], sizes = [8, 1], strides = [1, 1]} : vector<8x8xf32> to vector<8x1xf32>
    %11 = vector.broadcast %10 : vector<8x1xf32> to vector<8x128xf32>
    %12 = arith.mulf %11, %4 : vector<8x128xf32>
    %13 = arith.addf %12, %7 : vector<8x128xf32>
    %cst_8 = arith.constant dense<0.000000e+00> : vector<8x128xf32>
    %14 = tpu.matmul %8, %1, %cst_8 {dimension_numbers = #tpu.dot_dimension_numbers<[1], [0], [0], [1], [0, 0, 1, 1], [], []>} : vector<8x32xf32>, vector<32x128xf32>, vector<8x128xf32> -> vector<8x128xf32>
    %15 = arith.addf %13, %14 : vector<8x128xf32>
    %16 = arith.negf %15 : vector<8x128xf32>
    %17 = math.exp %16 : vector<8x128xf32>
    %cst_9 = arith.constant 1.000000e+00 : f32
    %18 = vector.broadcast %cst_9 : f32 to vector<8x128xf32>
    %19 = arith.addf %18, %17 : vector<8x128xf32>
    %20 = arith.divf %18, %19 : vector<8x128xf32>
    %21 = math.tanh %15 : vector<8x128xf32>
    %22 = vector.extract_strided_slice %20 {offsets = [0, 0], sizes = [8, 32], strides = [1, 1]} : vector<8x128xf32> to vector<8x32xf32>
    %23 = vector.extract_strided_slice %20 {offsets = [0, 32], sizes = [8, 32], strides = [1, 1]} : vector<8x128xf32> to vector<8x32xf32>
    %24 = vector.extract_strided_slice %21 {offsets = [0, 64], sizes = [8, 32], strides = [1, 1]} : vector<8x128xf32> to vector<8x32xf32>
    %25 = vector.extract_strided_slice %20 {offsets = [0, 96], sizes = [8, 32], strides = [1, 1]} : vector<8x128xf32> to vector<8x32xf32>
    %26 = arith.mulf %23, %9 : vector<8x32xf32>
    %27 = arith.mulf %22, %24 : vector<8x32xf32>
    %28 = arith.addf %26, %27 : vector<8x32xf32>
    %29 = math.tanh %28 : vector<8x32xf32>
    %30 = arith.mulf %25, %29 : vector<8x32xf32>
    %31 = vector.extract_strided_slice %0 {offsets = [0, 1], sizes = [8, 1], strides = [1, 1]} : vector<8x8xf32> to vector<8x1xf32>
    %32 = vector.broadcast %31 : vector<8x1xf32> to vector<8x128xf32>
    %33 = arith.mulf %32, %4 : vector<8x128xf32>
    %34 = arith.addf %33, %7 : vector<8x128xf32>
    %cst_10 = arith.constant dense<0.000000e+00> : vector<8x128xf32>
    %35 = tpu.matmul %30, %1, %cst_10 {dimension_numbers = #tpu.dot_dimension_numbers<[1], [0], [0], [1], [0, 0, 1, 1], [], []>} : vector<8x32xf32>, vector<32x128xf32>, vector<8x128xf32> -> vector<8x128xf32>
    %36 = arith.addf %34, %35 : vector<8x128xf32>
    %37 = arith.negf %36 : vector<8x128xf32>
    %38 = math.exp %37 : vector<8x128xf32>
    %cst_11 = arith.constant 1.000000e+00 : f32
    %39 = vector.broadcast %cst_11 : f32 to vector<8x128xf32>
    %40 = arith.addf %39, %38 : vector<8x128xf32>
    %41 = arith.divf %39, %40 : vector<8x128xf32>
    %42 = math.tanh %36 : vector<8x128xf32>
    %43 = vector.extract_strided_slice %41 {offsets = [0, 0], sizes = [8, 32], strides = [1, 1]} : vector<8x128xf32> to vector<8x32xf32>
    %44 = vector.extract_strided_slice %41 {offsets = [0, 32], sizes = [8, 32], strides = [1, 1]} : vector<8x128xf32> to vector<8x32xf32>
    %45 = vector.extract_strided_slice %42 {offsets = [0, 64], sizes = [8, 32], strides = [1, 1]} : vector<8x128xf32> to vector<8x32xf32>
    %46 = vector.extract_strided_slice %41 {offsets = [0, 96], sizes = [8, 32], strides = [1, 1]} : vector<8x128xf32> to vector<8x32xf32>
    %47 = arith.mulf %44, %28 : vector<8x32xf32>
    %48 = arith.mulf %43, %45 : vector<8x32xf32>
    %49 = arith.addf %47, %48 : vector<8x32xf32>
    %50 = math.tanh %49 : vector<8x32xf32>
    %51 = arith.mulf %46, %50 : vector<8x32xf32>
    %52 = vector.extract_strided_slice %0 {offsets = [0, 2], sizes = [8, 1], strides = [1, 1]} : vector<8x8xf32> to vector<8x1xf32>
    %53 = vector.broadcast %52 : vector<8x1xf32> to vector<8x128xf32>
    %54 = arith.mulf %53, %4 : vector<8x128xf32>
    %55 = arith.addf %54, %7 : vector<8x128xf32>
    %cst_12 = arith.constant dense<0.000000e+00> : vector<8x128xf32>
    %56 = tpu.matmul %51, %1, %cst_12 {dimension_numbers = #tpu.dot_dimension_numbers<[1], [0], [0], [1], [0, 0, 1, 1], [], []>} : vector<8x32xf32>, vector<32x128xf32>, vector<8x128xf32> -> vector<8x128xf32>
    %57 = arith.addf %55, %56 : vector<8x128xf32>
    %58 = arith.negf %57 : vector<8x128xf32>
    %59 = math.exp %58 : vector<8x128xf32>
    %cst_13 = arith.constant 1.000000e+00 : f32
    %60 = vector.broadcast %cst_13 : f32 to vector<8x128xf32>
    %61 = arith.addf %60, %59 : vector<8x128xf32>
    %62 = arith.divf %60, %61 : vector<8x128xf32>
    %63 = math.tanh %57 : vector<8x128xf32>
    %64 = vector.extract_strided_slice %62 {offsets = [0, 0], sizes = [8, 32], strides = [1, 1]} : vector<8x128xf32> to vector<8x32xf32>
    %65 = vector.extract_strided_slice %62 {offsets = [0, 32], sizes = [8, 32], strides = [1, 1]} : vector<8x128xf32> to vector<8x32xf32>
    %66 = vector.extract_strided_slice %63 {offsets = [0, 64], sizes = [8, 32], strides = [1, 1]} : vector<8x128xf32> to vector<8x32xf32>
    %67 = vector.extract_strided_slice %62 {offsets = [0, 96], sizes = [8, 32], strides = [1, 1]} : vector<8x128xf32> to vector<8x32xf32>
    %68 = arith.mulf %65, %49 : vector<8x32xf32>
    %69 = arith.mulf %64, %66 : vector<8x32xf32>
    %70 = arith.addf %68, %69 : vector<8x32xf32>
    %71 = math.tanh %70 : vector<8x32xf32>
    %72 = arith.mulf %67, %71 : vector<8x32xf32>
    %73 = vector.extract_strided_slice %0 {offsets = [0, 3], sizes = [8, 1], strides = [1, 1]} : vector<8x8xf32> to vector<8x1xf32>
    %74 = vector.broadcast %73 : vector<8x1xf32> to vector<8x128xf32>
    %75 = arith.mulf %74, %4 : vector<8x128xf32>
    %76 = arith.addf %75, %7 : vector<8x128xf32>
    %cst_14 = arith.constant dense<0.000000e+00> : vector<8x128xf32>
    %77 = tpu.matmul %72, %1, %cst_14 {dimension_numbers = #tpu.dot_dimension_numbers<[1], [0], [0], [1], [0, 0, 1, 1], [], []>} : vector<8x32xf32>, vector<32x128xf32>, vector<8x128xf32> -> vector<8x128xf32>
    %78 = arith.addf %76, %77 : vector<8x128xf32>
    %79 = arith.negf %78 : vector<8x128xf32>
    %80 = math.exp %79 : vector<8x128xf32>
    %cst_15 = arith.constant 1.000000e+00 : f32
    %81 = vector.broadcast %cst_15 : f32 to vector<8x128xf32>
    %82 = arith.addf %81, %80 : vector<8x128xf32>
    %83 = arith.divf %81, %82 : vector<8x128xf32>
    %84 = math.tanh %78 : vector<8x128xf32>
    %85 = vector.extract_strided_slice %83 {offsets = [0, 0], sizes = [8, 32], strides = [1, 1]} : vector<8x128xf32> to vector<8x32xf32>
    %86 = vector.extract_strided_slice %83 {offsets = [0, 32], sizes = [8, 32], strides = [1, 1]} : vector<8x128xf32> to vector<8x32xf32>
    %87 = vector.extract_strided_slice %84 {offsets = [0, 64], sizes = [8, 32], strides = [1, 1]} : vector<8x128xf32> to vector<8x32xf32>
    %88 = vector.extract_strided_slice %83 {offsets = [0, 96], sizes = [8, 32], strides = [1, 1]} : vector<8x128xf32> to vector<8x32xf32>
    %89 = arith.mulf %86, %70 : vector<8x32xf32>
    %90 = arith.mulf %85, %87 : vector<8x32xf32>
    %91 = arith.addf %89, %90 : vector<8x32xf32>
    %92 = math.tanh %91 : vector<8x32xf32>
    %93 = arith.mulf %88, %92 : vector<8x32xf32>
    %94 = vector.extract_strided_slice %0 {offsets = [0, 4], sizes = [8, 1], strides = [1, 1]} : vector<8x8xf32> to vector<8x1xf32>
    %95 = vector.broadcast %94 : vector<8x1xf32> to vector<8x128xf32>
    %96 = arith.mulf %95, %4 : vector<8x128xf32>
    %97 = arith.addf %96, %7 : vector<8x128xf32>
    %cst_16 = arith.constant dense<0.000000e+00> : vector<8x128xf32>
    %98 = tpu.matmul %93, %1, %cst_16 {dimension_numbers = #tpu.dot_dimension_numbers<[1], [0], [0], [1], [0, 0, 1, 1], [], []>} : vector<8x32xf32>, vector<32x128xf32>, vector<8x128xf32> -> vector<8x128xf32>
    %99 = arith.addf %97, %98 : vector<8x128xf32>
    %100 = arith.negf %99 : vector<8x128xf32>
    %101 = math.exp %100 : vector<8x128xf32>
    %cst_17 = arith.constant 1.000000e+00 : f32
    %102 = vector.broadcast %cst_17 : f32 to vector<8x128xf32>
    %103 = arith.addf %102, %101 : vector<8x128xf32>
    %104 = arith.divf %102, %103 : vector<8x128xf32>
    %105 = math.tanh %99 : vector<8x128xf32>
    %106 = vector.extract_strided_slice %104 {offsets = [0, 0], sizes = [8, 32], strides = [1, 1]} : vector<8x128xf32> to vector<8x32xf32>
    %107 = vector.extract_strided_slice %104 {offsets = [0, 32], sizes = [8, 32], strides = [1, 1]} : vector<8x128xf32> to vector<8x32xf32>
    %108 = vector.extract_strided_slice %105 {offsets = [0, 64], sizes = [8, 32], strides = [1, 1]} : vector<8x128xf32> to vector<8x32xf32>
    %109 = vector.extract_strided_slice %104 {offsets = [0, 96], sizes = [8, 32], strides = [1, 1]} : vector<8x128xf32> to vector<8x32xf32>
    %110 = arith.mulf %107, %91 : vector<8x32xf32>
    %111 = arith.mulf %106, %108 : vector<8x32xf32>
    %112 = arith.addf %110, %111 : vector<8x32xf32>
    %113 = math.tanh %112 : vector<8x32xf32>
    %114 = arith.mulf %109, %113 : vector<8x32xf32>
    %115 = vector.extract_strided_slice %0 {offsets = [0, 5], sizes = [8, 1], strides = [1, 1]} : vector<8x8xf32> to vector<8x1xf32>
    %116 = vector.broadcast %115 : vector<8x1xf32> to vector<8x128xf32>
    %117 = arith.mulf %116, %4 : vector<8x128xf32>
    %118 = arith.addf %117, %7 : vector<8x128xf32>
    %cst_18 = arith.constant dense<0.000000e+00> : vector<8x128xf32>
    %119 = tpu.matmul %114, %1, %cst_18 {dimension_numbers = #tpu.dot_dimension_numbers<[1], [0], [0], [1], [0, 0, 1, 1], [], []>} : vector<8x32xf32>, vector<32x128xf32>, vector<8x128xf32> -> vector<8x128xf32>
    %120 = arith.addf %118, %119 : vector<8x128xf32>
    %121 = arith.negf %120 : vector<8x128xf32>
    %122 = math.exp %121 : vector<8x128xf32>
    %cst_19 = arith.constant 1.000000e+00 : f32
    %123 = vector.broadcast %cst_19 : f32 to vector<8x128xf32>
    %124 = arith.addf %123, %122 : vector<8x128xf32>
    %125 = arith.divf %123, %124 : vector<8x128xf32>
    %126 = math.tanh %120 : vector<8x128xf32>
    %127 = vector.extract_strided_slice %125 {offsets = [0, 0], sizes = [8, 32], strides = [1, 1]} : vector<8x128xf32> to vector<8x32xf32>
    %128 = vector.extract_strided_slice %125 {offsets = [0, 32], sizes = [8, 32], strides = [1, 1]} : vector<8x128xf32> to vector<8x32xf32>
    %129 = vector.extract_strided_slice %126 {offsets = [0, 64], sizes = [8, 32], strides = [1, 1]} : vector<8x128xf32> to vector<8x32xf32>
    %130 = vector.extract_strided_slice %125 {offsets = [0, 96], sizes = [8, 32], strides = [1, 1]} : vector<8x128xf32> to vector<8x32xf32>
    %131 = arith.mulf %128, %112 : vector<8x32xf32>
    %132 = arith.mulf %127, %129 : vector<8x32xf32>
    %133 = arith.addf %131, %132 : vector<8x32xf32>
    %134 = math.tanh %133 : vector<8x32xf32>
    %135 = arith.mulf %130, %134 : vector<8x32xf32>
    %136 = vector.extract_strided_slice %0 {offsets = [0, 6], sizes = [8, 1], strides = [1, 1]} : vector<8x8xf32> to vector<8x1xf32>
    %137 = vector.broadcast %136 : vector<8x1xf32> to vector<8x128xf32>
    %138 = arith.mulf %137, %4 : vector<8x128xf32>
    %139 = arith.addf %138, %7 : vector<8x128xf32>
    %cst_20 = arith.constant dense<0.000000e+00> : vector<8x128xf32>
    %140 = tpu.matmul %135, %1, %cst_20 {dimension_numbers = #tpu.dot_dimension_numbers<[1], [0], [0], [1], [0, 0, 1, 1], [], []>} : vector<8x32xf32>, vector<32x128xf32>, vector<8x128xf32> -> vector<8x128xf32>
    %141 = arith.addf %139, %140 : vector<8x128xf32>
    %142 = arith.negf %141 : vector<8x128xf32>
    %143 = math.exp %142 : vector<8x128xf32>
    %cst_21 = arith.constant 1.000000e+00 : f32
    %144 = vector.broadcast %cst_21 : f32 to vector<8x128xf32>
    %145 = arith.addf %144, %143 : vector<8x128xf32>
    %146 = arith.divf %144, %145 : vector<8x128xf32>
    %147 = math.tanh %141 : vector<8x128xf32>
    %148 = vector.extract_strided_slice %146 {offsets = [0, 0], sizes = [8, 32], strides = [1, 1]} : vector<8x128xf32> to vector<8x32xf32>
    %149 = vector.extract_strided_slice %146 {offsets = [0, 32], sizes = [8, 32], strides = [1, 1]} : vector<8x128xf32> to vector<8x32xf32>
    %150 = vector.extract_strided_slice %147 {offsets = [0, 64], sizes = [8, 32], strides = [1, 1]} : vector<8x128xf32> to vector<8x32xf32>
    %151 = vector.extract_strided_slice %146 {offsets = [0, 96], sizes = [8, 32], strides = [1, 1]} : vector<8x128xf32> to vector<8x32xf32>
    %152 = arith.mulf %149, %133 : vector<8x32xf32>
    %153 = arith.mulf %148, %150 : vector<8x32xf32>
    %154 = arith.addf %152, %153 : vector<8x32xf32>
    %155 = math.tanh %154 : vector<8x32xf32>
    %156 = arith.mulf %151, %155 : vector<8x32xf32>
    %157 = vector.extract_strided_slice %0 {offsets = [0, 7], sizes = [8, 1], strides = [1, 1]} : vector<8x8xf32> to vector<8x1xf32>
    %158 = vector.broadcast %157 : vector<8x1xf32> to vector<8x128xf32>
    %159 = arith.mulf %158, %4 : vector<8x128xf32>
    %160 = arith.addf %159, %7 : vector<8x128xf32>
    %cst_22 = arith.constant dense<0.000000e+00> : vector<8x128xf32>
    %161 = tpu.matmul %156, %1, %cst_22 {dimension_numbers = #tpu.dot_dimension_numbers<[1], [0], [0], [1], [0, 0, 1, 1], [], []>} : vector<8x32xf32>, vector<32x128xf32>, vector<8x128xf32> -> vector<8x128xf32>
    %162 = arith.addf %160, %161 : vector<8x128xf32>
    %163 = arith.negf %162 : vector<8x128xf32>
    %164 = math.exp %163 : vector<8x128xf32>
    %cst_23 = arith.constant 1.000000e+00 : f32
    %165 = vector.broadcast %cst_23 : f32 to vector<8x128xf32>
    %166 = arith.addf %165, %164 : vector<8x128xf32>
    %167 = arith.divf %165, %166 : vector<8x128xf32>
    %168 = math.tanh %162 : vector<8x128xf32>
    %169 = vector.extract_strided_slice %167 {offsets = [0, 0], sizes = [8, 32], strides = [1, 1]} : vector<8x128xf32> to vector<8x32xf32>
    %170 = vector.extract_strided_slice %167 {offsets = [0, 32], sizes = [8, 32], strides = [1, 1]} : vector<8x128xf32> to vector<8x32xf32>
    %171 = vector.extract_strided_slice %168 {offsets = [0, 64], sizes = [8, 32], strides = [1, 1]} : vector<8x128xf32> to vector<8x32xf32>
    %172 = vector.extract_strided_slice %167 {offsets = [0, 96], sizes = [8, 32], strides = [1, 1]} : vector<8x128xf32> to vector<8x32xf32>
    %173 = arith.mulf %170, %154 : vector<8x32xf32>
    %174 = arith.mulf %169, %171 : vector<8x32xf32>
    %175 = arith.addf %173, %174 : vector<8x32xf32>
    %176 = math.tanh %175 : vector<8x32xf32>
    %177 = arith.mulf %172, %176 : vector<8x32xf32>
    %c0_24 = arith.constant 0 : index
    %c0_25 = arith.constant 0 : index
    %178 = vector.load %arg5[%c0_24, %c0_25] : memref<1x32xf32, #tpu.memory_space<vmem>>, vector<1x32xf32>
    %179 = vector.broadcast %178 : vector<1x32xf32> to vector<8x32xf32>
    %180 = arith.mulf %177, %179 : vector<8x32xf32>
    %cst_26 = arith.constant dense<0.000000e+00> : vector<8xf32>
    %181 = vector.multi_reduction <add>, %180, %cst_26 [1] : vector<8x32xf32> to vector<8xf32>
    %182 = vector.shape_cast %181 : vector<8xf32> to vector<8x1xf32>
    %c0_27 = arith.constant 0 : index
    %c0_28 = arith.constant 0 : index
    %183 = vector.load %arg6[%c0_27, %c0_28] : memref<1x1xf32, #tpu.memory_space<vmem>>, vector<1x1xf32>
    %184 = vector.broadcast %183 : vector<1x1xf32> to vector<8x1xf32>
    %185 = arith.addf %182, %184 : vector<8x1xf32>
    %c0_29 = arith.constant 0 : index
    %c0_30 = arith.constant 0 : index
    %186 = vector.load %arg7[%c0_29, %c0_30] : memref<8x1xf32, #tpu.memory_space<vmem>>, vector<8x1xf32>
    tpu.vector_store %arg7[%c0_29, %c0_30], %185 {strides = array<i32>} : memref<8x1xf32, #tpu.memory_space<vmem>>, vector<8x1xf32>,
    return
  }
  func.func @transform_0(%arg0: i32) -> (i32, i32) {
    %c0_i32 = arith.constant 0 : i32
    %c0_i32_0 = arith.constant 0 : i32
    return %arg0, %c0_i32 : i32, i32
  }
  func.func @transform_1(%arg0: i32) -> (i32, i32) {
    %c0_i32 = arith.constant 0 : i32
    %c0_i32_0 = arith.constant 0 : i32
    %c0_i32_1 = arith.constant 0 : i32
    return %c0_i32, %c0_i32_0 : i32, i32
  }
  func.func @transform_2(%arg0: i32) -> (i32, i32) {
    %c0_i32 = arith.constant 0 : i32
    %c0_i32_0 = arith.constant 0 : i32
    %c0_i32_1 = arith.constant 0 : i32
    return %c0_i32, %c0_i32_0 : i32, i32
  }
  func.func @transform_3(%arg0: i32) -> (i32, i32) {
    %c0_i32 = arith.constant 0 : i32
    %c0_i32_0 = arith.constant 0 : i32
    %c0_i32_1 = arith.constant 0 : i32
    return %c0_i32, %c0_i32_0 : i32, i32
  }
  func.func @transform_4(%arg0: i32) -> (i32, i32) {
    %c0_i32 = arith.constant 0 : i32
    %c0_i32_0 = arith.constant 0 : i32
    %c0_i32_1 = arith.constant 0 : i32
    return %c0_i32, %c0_i32_0 : i32, i32
  }
  func.func @transform_5(%arg0: i32) -> (i32, i32) {
    %c0_i32 = arith.constant 0 : i32
    %c0_i32_0 = arith.constant 0 : i32
    %c0_i32_1 = arith.constant 0 : i32
    return %c0_i32, %c0_i32_0 : i32, i32
  }
  func.func @transform_6(%arg0: i32) -> (i32, i32) {
    %c0_i32 = arith.constant 0 : i32
    %c0_i32_0 = arith.constant 0 : i32
    return %arg0, %c0_i32 : i32, i32
  }
}

</mosaic_0001>

<llo_original>
// kernel: lstm_forward_batched.1
$region0: #{lstm_forward_batched.1}
  #allocation0 [shape = 'u32[]', space=smem, size = 0x4, offset = 0x4, fixed_abs, tag = 'smem constant byte address 0x4 - core index']
  #allocation1 [shape = 'u32[144,128]{1,0:T(1,128)}', space=vmem, size = 0x12000, scoped, tag = 'internal scratch']
  #allocation2 [shape = 'f32[1,1]{1,0:T(1,128)S(1)}', space=vmem, size = 0x200, scoped, tag = 'scoped memory for lstm_forward_batched.1']
  %s0 = inlined_call_operand.hbm [shape: f32[8,8], index: 0, kind: input, shape index: {}]
  %s1 = inlined_call_operand.vmem [shape: f32[1,128], index: 1, kind: input, shape index: {}]
  %s2 = inlined_call_operand.hbm [shape: f32[32,128], index: 2, kind: input, shape index: {}]
  %s3 = inlined_call_operand.vmem [shape: f32[1,128], index: 3, kind: input, shape index: {}]
  %s4 = inlined_call_operand.vmem [shape: f32[1,32], index: 4, kind: input, shape index: {}]
  %s5 = inlined_call_operand.<no memory space> [shape: f32[1,1], index: 5, kind: input, shape index: {}]
  %s6 = inlined_call_operand.vmem [shape: f32[8,1], index: 6, kind: output, shape index: {}]
  %s7 = sld [smem:[#allocation0]]
  $region42: #{lstm_forward_batched.1} parent=0
    _
  %s9 = ssub.s32 1, %s7
  %s10 = scalar_select 0, %s9, %s7
  %v11 = vstv %s5
  %12 = vst [vmem:[#allocation2] sm:$0x1] %v11
  $region1: #{lstm_forward_batched.1} parent=0
    #allocation3 [shape = 'u8[4096]{0}', space=vmem, size = 0x1000, scoped, tag = 'input window, operand 0, single buffered']
    #allocation4 [shape = 's32[1]{0}', space=sflag, size = 0x4, scoped, tag = 'scoped memory for lstm_forward_batched.1']
    #allocation5 [shape = 'u8[16384]{0}', space=vmem, size = 0x4000, scoped, tag = 'input window, operand 2, single buffered']
    #allocation6 [shape = 's32[1]{0}', space=sflag, size = 0x4, scoped, tag = 'scoped memory for lstm_forward_batched.1']
    %13 = vsyncpa [#allocation4], 0
    %14 = vsyncpa [#allocation6], 0
    // Predicated region
    $region2: #{lstm_forward_batched.1} parent=1 // pred_check
      _
    $region3: #{lstm_forward_batched.1} parent=1 // pred_check_branch
      %16 = sbr.rel (0) target = $region5
    $region4: #{lstm_forward_batched.1} parent=1 // pred_region
      %s18 = ssub.s32 128, 128
      %19 = vsyncadd [#allocation4], %s18
      %s21 = sshll.u32 [#allocation3], 4
      %s22 = int_to_ptr.vmem [resolvable:$true] %s21
      %24 = dma.hbm_to_vmem [thread:$0]  %s0, 128, %s22, [#allocation4]
    $region5: #{lstm_forward_batched.1} parent=1 // pred_fallthru
      _
    // Predicated region
    $region6: #{lstm_forward_batched.1} parent=1 // pred_check
      _
    $region7: #{lstm_forward_batched.1} parent=1 // pred_check_branch
      %26 = sbr.rel (0) target = $region9
    $region8: #{lstm_forward_batched.1} parent=1 // pred_region
      _
    $region9: #{lstm_forward_batched.1} parent=1 // pred_fallthru
      _
    // Predicated region
    $region10: #{lstm_forward_batched.1} parent=1 // pred_check
      _
    $region11: #{lstm_forward_batched.1} parent=1 // pred_check_branch
      %28 = sbr.rel (0) target = $region13
    $region12: #{lstm_forward_batched.1} parent=1 // pred_region
      %s30 = ssub.s32 512, 512
      %31 = vsyncadd [#allocation6], %s30
      %s32 = sshll.u32 [#allocation5], 4
      %s33 = int_to_ptr.vmem [resolvable:$true] %s32
      %38 = dma.hbm_to_vmem [thread:$0]  %s2, 512, %s33, [#allocation6], 128, 128, 8
    $region13: #{lstm_forward_batched.1} parent=1 // pred_fallthru
      _
    // Predicated region
    $region14: #{lstm_forward_batched.1} parent=1 // pred_check
      _
    $region15: #{lstm_forward_batched.1} parent=1 // pred_check_branch
      %40 = sbr.rel (0) target = $region17
    $region16: #{lstm_forward_batched.1} parent=1 // pred_region
      _
    $region17: #{lstm_forward_batched.1} parent=1 // pred_fallthru
      _
    // Predicated region
    $region18: #{lstm_forward_batched.1} parent=1 // pred_check
      _
    $region19: #{lstm_forward_batched.1} parent=1 // pred_check_branch
      %42 = sbr.rel (0) target = $region21
    $region20: #{lstm_forward_batched.1} parent=1 // pred_region
      _
    $region21: #{lstm_forward_batched.1} parent=1 // pred_fallthru
      _
    // Predicated region
    $region22: #{lstm_forward_batched.1} parent=1 // pred_check
      _
    $region23: #{lstm_forward_batched.1} parent=1 // pred_check_branch
      %44 = sbr.rel (0) target = $region25
    $region24: #{lstm_forward_batched.1} parent=1 // pred_region
      _
    $region25: #{lstm_forward_batched.1} parent=1 // pred_fallthru
      _
    // Predicated region
    $region26: #{lstm_forward_batched.1} parent=1 // pred_check
      _
    $region27: #{lstm_forward_batched.1} parent=1 // pred_check_branch
      %46 = sbr.rel (0) target = $region29
    $region28: #{lstm_forward_batched.1} parent=1 // pred_region
      %47 = dma.done [#allocation4], 128
    $region29: #{lstm_forward_batched.1} parent=1 // pred_fallthru
      _
    // Predicated region
    $region30: #{lstm_forward_batched.1} parent=1 // pred_check
      _
    $region31: #{lstm_forward_batched.1} parent=1 // pred_check_branch
      %49 = sbr.rel (0) target = $region33
    $region32: #{lstm_forward_batched.1} parent=1 // pred_region
      %50 = dma.done [#allocation6], 512
    $region33: #{lstm_forward_batched.1} parent=1 // pred_fallthru
      _
    %v51 = vld [vmem:[#allocation3] sm:$0xff]
    %v52 = vld [vmem:[#allocation5] sm:$0xff]
    %v53 = vld [vmem:[#allocation5 + $0x8] sm:$0xff]
    %v54 = vld [vmem:[#allocation5 + $0x10] sm:$0xff]
    %v55 = vld [vmem:[#allocation5 + $0x18] sm:$0xff]
    %v56 = vld [vmem:[%s1] sm:$0x1]
    %v58 = vlaneseq
    %v59 = vshrl.u32 %v58, 7
    %v60 = vsub.s32 0, %v59
    %v61 = vrot.slane %v56, %v60
    %v63 = vld [vmem:[%s3] sm:$0x1]
    %v65 = vlaneseq
    %v66 = vshrl.u32 %v65, 7
    %v67 = vsub.s32 0, %v66
    %v68 = vrot.slane %v63, %v67
    %71 = vset.pattern.permute.xlu0 0
    %72 = vperm.xlu0 %71, %v51
    %v73 = vpop.permute.xlu0 %72
    %v75 = vmul.f32 %v73, %v61
    %v76 = vadd.f32 %v75, %v68
    %vm77 = vcmask 261120
    %v79 = vsel %vm77, 0.0, 0
    %81 = vmatprep.subr.mxu0 0.0
    %82 = vmatpush1.msra.mxu0 0.0
    %83 = vmatprep.subr.mxu0 0.0
    %84 = vmatpush1.msra.mxu0 0.0
    %85 = vmatprep.subr.mxu0 0.0
    %86 = vmatpush1.msra.mxu0 0.0
    %87 = vmatprep.subr.mxu0 0.0
    %88 = vmatpush1.msra.mxu0 0.0
    %89 = vmatprep.subr.mxu0 0.0
    %90 = vmatpush1.msra.mxu0 0.0
    %91 = vmatprep.subr.mxu0 0.0
    %92 = vmatpush1.msra.mxu0 0.0
    %93 = vmatprep.subr.mxu0 0.0
    %94 = vmatpush1.msra.mxu0 0.0
    %95 = vmatprep.subr.mxu0 0.0
    %96 = vmatpush1.msra.mxu0 0.0
    %97 = vmatprep.subr.mxu0 0.0
    %98 = vmatpush1.msra.mxu0 0.0
    %99 = vmatprep.subr.mxu0 0.0
    %100 = vmatpush1.msra.mxu0 0.0
    %101 = vmatprep.subr.mxu0 0.0
    %102 = vmatpush1.msra.mxu0 0.0
    %103 = vmatprep.subr.mxu0 0.0
    %104 = vmatpush1.msra.mxu0 0.0
    %105 = vmatprep.subr.mxu0 0.0
    %106 = vmatpush1.msra.mxu0 %v55
    %107 = vmatprep.subr.mxu0 0.0
    %108 = vmatpush1.msra.mxu0 %v54
    %109 = vmatprep.subr.mxu0 0.0
    %110 = vmatpush1.msra.mxu0 %v53
    %111 = vmatprep.subr.mxu0 0.0
    %112 = vmatpush1.msra.mxu0 %v52
    %113 = vmatprep.subr.mxu0 0.0
    %114 = vmatpush2.msra.mxu0 0.0
    %115 = vmatprep.subr.mxu0 0.0
    %116 = vmatpush2.msra.mxu0 0.0
    %117 = vmatprep.subr.mxu0 0.0
    %118 = vmatpush2.msra.mxu0 0.0
    %119 = vmatprep.subr.mxu0 0.0
    %120 = vmatpush2.msra.mxu0 0.0
    %121 = vmatprep.subr.mxu0 0.0
    %122 = vmatpush2.msra.mxu0 0.0
    %123 = vmatprep.subr.mxu0 0.0
    %124 = vmatpush2.msra.mxu0 0.0
    %125 = vmatprep.subr.mxu0 0.0
    %126 = vmatpush2.msra.mxu0 0.0
    %127 = vmatprep.subr.mxu0 0.0
    %128 = vmatpush2.msra.mxu0 0.0
    %129 = vmatprep.subr.mxu0 0.0
    %130 = vmatpush2.msra.mxu0 0.0
    %131 = vmatprep.subr.mxu0 0.0
    %132 = vmatpush2.msra.mxu0 0.0
    %133 = vmatprep.subr.mxu0 0.0
    %134 = vmatpush2.msra.mxu0 0.0
    %135 = vmatprep.subr.mxu0 0.0
    %136 = vmatpush2.msra.mxu0 0.0
    %137 = vmatprep.subr.mxu0 0.0
    %138 = vmatpush2.msra.mxu0 0.0
    %139 = vmatprep.subr.mxu0 0.0
    %140 = vmatpush2.msra.mxu0 0.0
    %141 = vmatprep.subr.mxu0 0.0
    %142 = vmatpush2.msra.mxu0 0.0
    %143 = vmatprep.subr.mxu0 0.0
    %144 = vmatpush2.msra.mxu0 0.0
    %145 = vmatprep.mubr.f32.mxu0 0.0
    %146 = vmatmul.mubr.f32.gmra.mxu0 %v79
    %v147 = vpop.f32.mrf.mxu0
    %v148 = vadd.f32 0.0, %v147
    %v149 = vpop.f32.mrf.mxu0
    %150 = vdwg.mxu0
    %v151 = vadd.f32 %v76, %v148
    %v152 = vxor.u32 %v151, 2147483648
    %v153 = vmul.f32 %v152, 1.442695
    %v154 = vpow.pop %v153
    %v155 = vadd.f32 %v154, 1.0
    %v156 = vrcp.pop %v155
    %v157 = vmul.f32 1.0, %v156
    %v158 = vtanh.pop %v151
    %v159 = vmul.f32 %v157, 0.0
    %161 = vrot.lane.b32.xlu0 %v158, 64
    %v162 = vpop.permute.xlu0 %161
    %v164 = vmul.f32 %v157, %v162
    %166 = vrot.lane.b32.xlu0 %v164, 32
    %v167 = vpop.permute.xlu0 %166
    %v169 = vadd.f32 %v159, %v167
    %v170 = vtanh.pop %v169
    %172 = vrot.lane.b32.xlu0 %v170, 64
    %v173 = vpop.permute.xlu0 %172
    %v175 = vmul.f32 %v157, %v173
    %176 = vset.pattern.permute.xlu0 1
    %177 = vperm.xlu0 %176, %v51
    %v178 = vpop.permute.xlu0 %177
    %v180 = vmul.f32 %v178, %v61
    %v181 = vadd.f32 %v180, %v68
    %183 = vrot.lane.b32.xlu0 %v175, 32
    %v184 = vpop.permute.xlu0 %183
    %v185 = vsel %vm77, %v184, 0
    %187 = vmatprep.subr.mxu0 0.0
    %188 = vmatpush1.msra.mxu0 0.0
    %189 = vmatprep.subr.mxu0 0.0
    %190 = vmatpush1.msra.mxu0 0.0
    %191 = vmatprep.subr.mxu0 0.0
    %192 = vmatpush1.msra.mxu0 0.0
    %193 = vmatprep.subr.mxu0 0.0
    %194 = vmatpush1.msra.mxu0 0.0
    %195 = vmatprep.subr.mxu0 0.0
    %196 = vmatpush1.msra.mxu0 0.0
    %197 = vmatprep.subr.mxu0 0.0
    %198 = vmatpush1.msra.mxu0 0.0
    %199 = vmatprep.subr.mxu0 0.0
    %200 = vmatpush1.msra.mxu0 0.0
    %201 = vmatprep.subr.mxu0 0.0
    %202 = vmatpush1.msra.mxu0 0.0
    %203 = vmatprep.subr.mxu0 0.0
    %204 = vmatpush1.msra.mxu0 0.0
    %205 = vmatprep.subr.mxu0 0.0
    %206 = vmatpush1.msra.mxu0 0.0
    %207 = vmatprep.subr.mxu0 0.0
    %208 = vmatpush1.msra.mxu0 0.0
    %209 = vmatprep.subr.mxu0 0.0
    %210 = vmatpush1.msra.mxu0 0.0
    %211 = vmatprep.subr.mxu0 0.0
    %212 = vmatpush1.msra.mxu0 %v55
    %213 = vmatprep.subr.mxu0 0.0
    %214 = vmatpush1.msra.mxu0 %v54
    %215 = vmatprep.subr.mxu0 0.0
    %216 = vmatpush1.msra.mxu0 %v53
    %217 = vmatprep.subr.mxu0 0.0
    %218 = vmatpush1.msra.mxu0 %v52
    %219 = vmatprep.subr.mxu0 0.0
    %220 = vmatpush2.msra.mxu0 0.0
    %221 = vmatprep.subr.mxu0 0.0
    %222 = vmatpush2.msra.mxu0 0.0
    %223 = vmatprep.subr.mxu0 0.0
    %224 = vmatpush2.msra.mxu0 0.0
    %225 = vmatprep.subr.mxu0 0.0
    %226 = vmatpush2.msra.mxu0 0.0
    %227 = vmatprep.subr.mxu0 0.0
    %228 = vmatpush2.msra.mxu0 0.0
    %229 = vmatprep.subr.mxu0 0.0
    %230 = vmatpush2.msra.mxu0 0.0
    %231 = vmatprep.subr.mxu0 0.0
    %232 = vmatpush2.msra.mxu0 0.0
    %233 = vmatprep.subr.mxu0 0.0
    %234 = vmatpush2.msra.mxu0 0.0
    %235 = vmatprep.subr.mxu0 0.0
    %236 = vmatpush2.msra.mxu0 0.0
    %237 = vmatprep.subr.mxu0 0.0
    %238 = vmatpush2.msra.mxu0 0.0
    %239 = vmatprep.subr.mxu0 0.0
    %240 = vmatpush2.msra.mxu0 0.0
    %241 = vmatprep.subr.mxu0 0.0
    %242 = vmatpush2.msra.mxu0 0.0
    %243 = vmatprep.subr.mxu0 0.0
    %244 = vmatpush2.msra.mxu0 0.0
    %245 = vmatprep.subr.mxu0 0.0
    %246 = vmatpush2.msra.mxu0 0.0
    %247 = vmatprep.subr.mxu0 0.0
    %248 = vmatpush2.msra.mxu0 0.0
    %249 = vmatprep.subr.mxu0 0.0
    %250 = vmatpush2.msra.mxu0 0.0
    %251 = vmatprep.mubr.f32.mxu0 0.0
    %252 = vmatmul.mubr.f32.gmra.mxu0 %v185
    %v253 = vpop.f32.mrf.mxu0
    %v254 = vadd.f32 0.0, %v253
    %v255 = vpop.f32.mrf.mxu0
    %256 = vdwg.mxu0
    %v257 = vadd.f32 %v181, %v254
    %v258 = vxor.u32 %v257, 2147483648
    %v259 = vmul.f32 %v258, 1.442695
    %v260 = vpow.pop %v259
    %v261 = vadd.f32 %v260, 1.0
    %v262 = vrcp.pop %v261
    %v263 = vmul.f32 1.0, %v262
    %v264 = vtanh.pop %v257
    %v265 = vmul.f32 %v263, %v169
    %267 = vrot.lane.b32.xlu0 %v264, 64
    %v268 = vpop.permute.xlu0 %267
    %v270 = vmul.f32 %v263, %v268
    %272 = vrot.lane.b32.xlu0 %v270, 32
    %v273 = vpop.permute.xlu0 %272
    %v275 = vadd.f32 %v265, %v273
    %v276 = vtanh.pop %v275
    %278 = vrot.lane.b32.xlu0 %v276, 64
    %v279 = vpop.permute.xlu0 %278
    %v281 = vmul.f32 %v263, %v279
    %282 = vset.pattern.permute.xlu0 2
    %283 = vperm.xlu0 %282, %v51
    %v284 = vpop.permute.xlu0 %283
    %v286 = vmul.f32 %v284, %v61
    %v287 = vadd.f32 %v286, %v68
    %289 = vrot.lane.b32.xlu0 %v281, 32
    %v290 = vpop.permute.xlu0 %289
    %v291 = vsel %vm77, %v290, 0
    %293 = vmatprep.subr.mxu0 0.0
    %294 = vmatpush1.msra.mxu0 0.0
    %295 = vmatprep.subr.mxu0 0.0
    %296 = vmatpush1.msra.mxu0 0.0
    %297 = vmatprep.subr.mxu0 0.0
    %298 = vmatpush1.msra.mxu0 0.0
    %299 = vmatprep.subr.mxu0 0.0
    %300 = vmatpush1.msra.mxu0 0.0
    %301 = vmatprep.subr.mxu0 0.0
    %302 = vmatpush1.msra.mxu0 0.0
    %303 = vmatprep.subr.mxu0 0.0
    %304 = vmatpush1.msra.mxu0 0.0
    %305 = vmatprep.subr.mxu0 0.0
    %306 = vmatpush1.msra.mxu0 0.0
    %307 = vmatprep.subr.mxu0 0.0
    %308 = vmatpush1.msra.mxu0 0.0
    %309 = vmatprep.subr.mxu0 0.0
    %310 = vmatpush1.msra.mxu0 0.0
    %311 = vmatprep.subr.mxu0 0.0
    %312 = vmatpush1.msra.mxu0 0.0
    %313 = vmatprep.subr.mxu0 0.0
    %314 = vmatpush1.msra.mxu0 0.0
    %315 = vmatprep.subr.mxu0 0.0
    %316 = vmatpush1.msra.mxu0 0.0
    %317 = vmatprep.subr.mxu0 0.0
    %318 = vmatpush1.msra.mxu0 %v55
    %319 = vmatprep.subr.mxu0 0.0
    %320 = vmatpush1.msra.mxu0 %v54
    %321 = vmatprep.subr.mxu0 0.0
    %322 = vmatpush1.msra.mxu0 %v53
    %323 = vmatprep.subr.mxu0 0.0
    %324 = vmatpush1.msra.mxu0 %v52
    %325 = vmatprep.subr.mxu0 0.0
    %326 = vmatpush2.msra.mxu0 0.0
    %327 = vmatprep.subr.mxu0 0.0
    %328 = vmatpush2.msra.mxu0 0.0
    %329 = vmatprep.subr.mxu0 0.0
    %330 = vmatpush2.msra.mxu0 0.0
    %331 = vmatprep.subr.mxu0 0.0
    %332 = vmatpush2.msra.mxu0 0.0
    %333 = vmatprep.subr.mxu0 0.0
    %334 = vmatpush2.msra.mxu0 0.0
    %335 = vmatprep.subr.mxu0 0.0
    %336 = vmatpush2.msra.mxu0 0.0
    %337 = vmatprep.subr.mxu0 0.0
    %338 = vmatpush2.msra.mxu0 0.0
    %339 = vmatprep.subr.mxu0 0.0
    %340 = vmatpush2.msra.mxu0 0.0
    %341 = vmatprep.subr.mxu0 0.0
    %342 = vmatpush2.msra.mxu0 0.0
    %343 = vmatprep.subr.mxu0 0.0
    %344 = vmatpush2.msra.mxu0 0.0
    %345 = vmatprep.subr.mxu0 0.0
    %346 = vmatpush2.msra.mxu0 0.0
    %347 = vmatprep.subr.mxu0 0.0
    %348 = vmatpush2.msra.mxu0 0.0
    %349 = vmatprep.subr.mxu0 0.0
    %350 = vmatpush2.msra.mxu0 0.0
    %351 = vmatprep.subr.mxu0 0.0
    %352 = vmatpush2.msra.mxu0 0.0
    %353 = vmatprep.subr.mxu0 0.0
    %354 = vmatpush2.msra.mxu0 0.0
    %355 = vmatprep.subr.mxu0 0.0
    %356 = vmatpush2.msra.mxu0 0.0
    %357 = vmatprep.mubr.f32.mxu0 0.0
    %358 = vmatmul.mubr.f32.gmra.mxu0 %v291
    %v359 = vpop.f32.mrf.mxu0
    %v360 = vadd.f32 0.0, %v359
    %v361 = vpop.f32.mrf.mxu0
    %362 = vdwg.mxu0
    %v363 = vadd.f32 %v287, %v360
    %v364 = vxor.u32 %v363, 2147483648
    %v365 = vmul.f32 %v364, 1.442695
    %v366 = vpow.pop %v365
    %v367 = vadd.f32 %v366, 1.0
    %v368 = vrcp.pop %v367
    %v369 = vmul.f32 1.0, %v368
    %v370 = vtanh.pop %v363
    %v371 = vmul.f32 %v369, %v275
    %373 = vrot.lane.b32.xlu0 %v370, 64
    %v374 = vpop.permute.xlu0 %373
    %v376 = vmul.f32 %v369, %v374
    %378 = vrot.lane.b32.xlu0 %v376, 32
    %v379 = vpop.permute.xlu0 %378
    %v381 = vadd.f32 %v371, %v379
    %v382 = vtanh.pop %v381
    %384 = vrot.lane.b32.xlu0 %v382, 64
    %v385 = vpop.permute.xlu0 %384
    %v387 = vmul.f32 %v369, %v385
    %388 = vset.pattern.permute.xlu0 3
    %389 = vperm.xlu0 %388, %v51
    %v390 = vpop.permute.xlu0 %389
    %v392 = vmul.f32 %v390, %v61
    %v393 = vadd.f32 %v392, %v68
    %395 = vrot.lane.b32.xlu0 %v387, 32
    %v396 = vpop.permute.xlu0 %395
    %v397 = vsel %vm77, %v396, 0
    %399 = vmatprep.subr.mxu0 0.0
    %400 = vmatpush1.msra.mxu0 0.0
    %401 = vmatprep.subr.mxu0 0.0
    %402 = vmatpush1.msra.mxu0 0.0
    %403 = vmatprep.subr.mxu0 0.0
    %404 = vmatpush1.msra.mxu0 0.0
    %405 = vmatprep.subr.mxu0 0.0
    %406 = vmatpush1.msra.mxu0 0.0
    %407 = vmatprep.subr.mxu0 0.0
    %408 = vmatpush1.msra.mxu0 0.0
    %409 = vmatprep.subr.mxu0 0.0
    %410 = vmatpush1.msra.mxu0 0.0
    %411 = vmatprep.subr.mxu0 0.0
    %412 = vmatpush1.msra.mxu0 0.0
    %413 = vmatprep.subr.mxu0 0.0
    %414 = vmatpush1.msra.mxu0 0.0
    %415 = vmatprep.subr.mxu0 0.0
    %416 = vmatpush1.msra.mxu0 0.0
    %417 = vmatprep.subr.mxu0 0.0
    %418 = vmatpush1.msra.mxu0 0.0
    %419 = vmatprep.subr.mxu0 0.0
    %420 = vmatpush1.msra.mxu0 0.0
    %421 = vmatprep.subr.mxu0 0.0
    %422 = vmatpush1.msra.mxu0 0.0
    %423 = vmatprep.subr.mxu0 0.0
    %424 = vmatpush1.msra.mxu0 %v55
    %425 = vmatprep.subr.mxu0 0.0
    %426 = vmatpush1.msra.mxu0 %v54
    %427 = vmatprep.subr.mxu0 0.0
    %428 = vmatpush1.msra.mxu0 %v53
    %429 = vmatprep.subr.mxu0 0.0
    %430 = vmatpush1.msra.mxu0 %v52
    %431 = vmatprep.subr.mxu0 0.0
    %432 = vmatpush2.msra.mxu0 0.0
    %433 = vmatprep.subr.mxu0 0.0
    %434 = vmatpush2.msra.mxu0 0.0
    %435 = vmatprep.subr.mxu0 0.0
    %436 = vmatpush2.msra.mxu0 0.0
    %437 = vmatprep.subr.mxu0 0.0
    %438 = vmatpush2.msra.mxu0 0.0
    %439 = vmatprep.subr.mxu0 0.0
    %440 = vmatpush2.msra.mxu0 0.0
    %441 = vmatprep.subr.mxu0 0.0
    %442 = vmatpush2.msra.mxu0 0.0
    %443 = vmatprep.subr.mxu0 0.0
    %444 = vmatpush2.msra.mxu0 0.0
    %445 = vmatprep.subr.mxu0 0.0
    %446 = vmatpush2.msra.mxu0 0.0
    %447 = vmatprep.subr.mxu0 0.0
    %448 = vmatpush2.msra.mxu0 0.0
    %449 = vmatprep.subr.mxu0 0.0
    %450 = vmatpush2.msra.mxu0 0.0
    %451 = vmatprep.subr.mxu0 0.0
    %452 = vmatpush2.msra.mxu0 0.0
    %453 = vmatprep.subr.mxu0 0.0
    %454 = vmatpush2.msra.mxu0 0.0
    %455 = vmatprep.subr.mxu0 0.0
    %456 = vmatpush2.msra.mxu0 0.0
    %457 = vmatprep.subr.mxu0 0.0
    %458 = vmatpush2.msra.mxu0 0.0
    %459 = vmatprep.subr.mxu0 0.0
    %460 = vmatpush2.msra.mxu0 0.0
    %461 = vmatprep.subr.mxu0 0.0
    %462 = vmatpush2.msra.mxu0 0.0
    %463 = vmatprep.mubr.f32.mxu0 0.0
    %464 = vmatmul.mubr.f32.gmra.mxu0 %v397
    %v465 = vpop.f32.mrf.mxu0
    %v466 = vadd.f32 0.0, %v465
    %v467 = vpop.f32.mrf.mxu0
    %468 = vdwg.mxu0
    %v469 = vadd.f32 %v393, %v466
    %v470 = vxor.u32 %v469, 2147483648
    %v471 = vmul.f32 %v470, 1.442695
    %v472 = vpow.pop %v471
    %v473 = vadd.f32 %v472, 1.0
    %v474 = vrcp.pop %v473
    %v475 = vmul.f32 1.0, %v474
    %v476 = vtanh.pop %v469
    %v477 = vmul.f32 %v475, %v381
    %479 = vrot.lane.b32.xlu0 %v476, 64
    %v480 = vpop.permute.xlu0 %479
    %v482 = vmul.f32 %v475, %v480
    %484 = vrot.lane.b32.xlu0 %v482, 32
    %v485 = vpop.permute.xlu0 %484
    %v487 = vadd.f32 %v477, %v485
    %v488 = vtanh.pop %v487
    %490 = vrot.lane.b32.xlu0 %v488, 64
    %v491 = vpop.permute.xlu0 %490
    %v493 = vmul.f32 %v475, %v491
    %494 = vset.pattern.permute.xlu0 4
    %495 = vperm.xlu0 %494, %v51
    %v496 = vpop.permute.xlu0 %495
    %v498 = vmul.f32 %v496, %v61
    %v499 = vadd.f32 %v498, %v68
    %501 = vrot.lane.b32.xlu0 %v493, 32
    %v502 = vpop.permute.xlu0 %501
    %v503 = vsel %vm77, %v502, 0
    %505 = vmatprep.subr.mxu0 0.0
    %506 = vmatpush1.msra.mxu0 0.0
    %507 = vmatprep.subr.mxu0 0.0
    %508 = vmatpush1.msra.mxu0 0.0
    %509 = vmatprep.subr.mxu0 0.0
    %510 = vmatpush1.msra.mxu0 0.0
    %511 = vmatprep.subr.mxu0 0.0
    %512 = vmatpush1.msra.mxu0 0.0
    %513 = vmatprep.subr.mxu0 0.0
    %514 = vmatpush1.msra.mxu0 0.0
    %515 = vmatprep.subr.mxu0 0.0
    %516 = vmatpush1.msra.mxu0 0.0
    %517 = vmatprep.subr.mxu0 0.0
    %518 = vmatpush1.msra.mxu0 0.0
    %519 = vmatprep.subr.mxu0 0.0
    %520 = vmatpush1.msra.mxu0 0.0
    %521 = vmatprep.subr.mxu0 0.0
    %522 = vmatpush1.msra.mxu0 0.0
    %523 = vmatprep.subr.mxu0 0.0
    %524 = vmatpush1.msra.mxu0 0.0
    %525 = vmatprep.subr.mxu0 0.0
    %526 = vmatpush1.msra.mxu0 0.0
    %527 = vmatprep.subr.mxu0 0.0
    %528 = vmatpush1.msra.mxu0 0.0
    %529 = vmatprep.subr.mxu0 0.0
    %530 = vmatpush1.msra.mxu0 %v55
    %531 = vmatprep.subr.mxu0 0.0
    %532 = vmatpush1.msra.mxu0 %v54
    %533 = vmatprep.subr.mxu0 0.0
    %534 = vmatpush1.msra.mxu0 %v53
    %535 = vmatprep.subr.mxu0 0.0
    %536 = vmatpush1.msra.mxu0 %v52
    %537 = vmatprep.subr.mxu0 0.0
    %538 = vmatpush2.msra.mxu0 0.0
    %539 = vmatprep.subr.mxu0 0.0
    %540 = vmatpush2.msra.mxu0 0.0
    %541 = vmatprep.subr.mxu0 0.0
    %542 = vmatpush2.msra.mxu0 0.0
    %543 = vmatprep.subr.mxu0 0.0
    %544 = vmatpush2.msra.mxu0 0.0
    %545 = vmatprep.subr.mxu0 0.0
    %546 = vmatpush2.msra.mxu0 0.0
    %547 = vmatprep.subr.mxu0 0.0
    %548 = vmatpush2.msra.mxu0 0.0
    %549 = vmatprep.subr.mxu0 0.0
    %550 = vmatpush2.msra.mxu0 0.0
    %551 = vmatprep.subr.mxu0 0.0
    %552 = vmatpush2.msra.mxu0 0.0
    %553 = vmatprep.subr.mxu0 0.0
    %554 = vmatpush2.msra.mxu0 0.0
    %555 = vmatprep.subr.mxu0 0.0
    %556 = vmatpush2.msra.mxu0 0.0
    %557 = vmatprep.subr.mxu0 0.0
    %558 = vmatpush2.msra.mxu0 0.0
    %559 = vmatprep.subr.mxu0 0.0
    %560 = vmatpush2.msra.mxu0 0.0
    %561 = vmatprep.subr.mxu0 0.0
    %562 = vmatpush2.msra.mxu0 0.0
    %563 = vmatprep.subr.mxu0 0.0
    %564 = vmatpush2.msra.mxu0 0.0
    %565 = vmatprep.subr.mxu0 0.0
    %566 = vmatpush2.msra.mxu0 0.0
    %567 = vmatprep.subr.mxu0 0.0
    %568 = vmatpush2.msra.mxu0 0.0
    %569 = vmatprep.mubr.f32.mxu0 0.0
    %570 = vmatmul.mubr.f32.gmra.mxu0 %v503
    %v571 = vpop.f32.mrf.mxu0
    %v572 = vadd.f32 0.0, %v571
    %v573 = vpop.f32.mrf.mxu0
    %574 = vdwg.mxu0
    %v575 = vadd.f32 %v499, %v572
    %v576 = vxor.u32 %v575, 2147483648
    %v577 = vmul.f32 %v576, 1.442695
    %v578 = vpow.pop %v577
    %v579 = vadd.f32 %v578, 1.0
    %v580 = vrcp.pop %v579
    %v581 = vmul.f32 1.0, %v580
    %v582 = vtanh.pop %v575
    %v583 = vmul.f32 %v581, %v487
    %585 = vrot.lane.b32.xlu0 %v582, 64
    %v586 = vpop.permute.xlu0 %585
    %v588 = vmul.f32 %v581, %v586
    %590 = vrot.lane.b32.xlu0 %v588, 32
    %v591 = vpop.permute.xlu0 %590
    %v593 = vadd.f32 %v583, %v591
    %v594 = vtanh.pop %v593
    %596 = vrot.lane.b32.xlu0 %v594, 64
    %v597 = vpop.permute.xlu0 %596
    %v599 = vmul.f32 %v581, %v597
    %600 = vset.pattern.permute.xlu0 5
    %601 = vperm.xlu0 %600, %v51
    %v602 = vpop.permute.xlu0 %601
    %v604 = vmul.f32 %v602, %v61
    %v605 = vadd.f32 %v604, %v68
    %607 = vrot.lane.b32.xlu0 %v599, 32
    %v608 = vpop.permute.xlu0 %607
    %v609 = vsel %vm77, %v608, 0
    %611 = vmatprep.subr.mxu0 0.0
    %612 = vmatpush1.msra.mxu0 0.0
    %613 = vmatprep.subr.mxu0 0.0
    %614 = vmatpush1.msra.mxu0 0.0
    %615 = vmatprep.subr.mxu0 0.0
    %616 = vmatpush1.msra.mxu0 0.0
    %617 = vmatprep.subr.mxu0 0.0
    %618 = vmatpush1.msra.mxu0 0.0
    %619 = vmatprep.subr.mxu0 0.0
    %620 = vmatpush1.msra.mxu0 0.0
    %621 = vmatprep.subr.mxu0 0.0
    %622 = vmatpush1.msra.mxu0 0.0
    %623 = vmatprep.subr.mxu0 0.0
    %624 = vmatpush1.msra.mxu0 0.0
    %625 = vmatprep.subr.mxu0 0.0
    %626 = vmatpush1.msra.mxu0 0.0
    %627 = vmatprep.subr.mxu0 0.0
    %628 = vmatpush1.msra.mxu0 0.0
    %629 = vmatprep.subr.mxu0 0.0
    %630 = vmatpush1.msra.mxu0 0.0
    %631 = vmatprep.subr.mxu0 0.0
    %632 = vmatpush1.msra.mxu0 0.0
    %633 = vmatprep.subr.mxu0 0.0
    %634 = vmatpush1.msra.mxu0 0.0
    %635 = vmatprep.subr.mxu0 0.0
    %636 = vmatpush1.msra.mxu0 %v55
    %637 = vmatprep.subr.mxu0 0.0
    %638 = vmatpush1.msra.mxu0 %v54
    %639 = vmatprep.subr.mxu0 0.0
    %640 = vmatpush1.msra.mxu0 %v53
    %641 = vmatprep.subr.mxu0 0.0
    %642 = vmatpush1.msra.mxu0 %v52
    %643 = vmatprep.subr.mxu0 0.0
    %644 = vmatpush2.msra.mxu0 0.0
    %645 = vmatprep.subr.mxu0 0.0
    %646 = vmatpush2.msra.mxu0 0.0
    %647 = vmatprep.subr.mxu0 0.0
    %648 = vmatpush2.msra.mxu0 0.0
    %649 = vmatprep.subr.mxu0 0.0
    %650 = vmatpush2.msra.mxu0 0.0
    %651 = vmatprep.subr.mxu0 0.0
    %652 = vmatpush2.msra.mxu0 0.0
    %653 = vmatprep.subr.mxu0 0.0
    %654 = vmatpush2.msra.mxu0 0.0
    %655 = vmatprep.subr.mxu0 0.0
    %656 = vmatpush2.msra.mxu0 0.0
    %657 = vmatprep.subr.mxu0 0.0
    %658 = vmatpush2.msra.mxu0 0.0
    %659 = vmatprep.subr.mxu0 0.0
    %660 = vmatpush2.msra.mxu0 0.0
    %661 = vmatprep.subr.mxu0 0.0
    %662 = vmatpush2.msra.mxu0 0.0
    %663 = vmatprep.subr.mxu0 0.0
    %664 = vmatpush2.msra.mxu0 0.0
    %665 = vmatprep.subr.mxu0 0.0
    %666 = vmatpush2.msra.mxu0 0.0
    %667 = vmatprep.subr.mxu0 0.0
    %668 = vmatpush2.msra.mxu0 0.0
    %669 = vmatprep.subr.mxu0 0.0
    %670 = vmatpush2.msra.mxu0 0.0
    %671 = vmatprep.subr.mxu0 0.0
    %672 = vmatpush2.msra.mxu0 0.0
    %673 = vmatprep.subr.mxu0 0.0
    %674 = vmatpush2.msra.mxu0 0.0
    %675 = vmatprep.mubr.f32.mxu0 0.0
    %676 = vmatmul.mubr.f32.gmra.mxu0 %v609
    %v677 = vpop.f32.mrf.mxu0
    %v678 = vadd.f32 0.0, %v677
    %v679 = vpop.f32.mrf.mxu0
    %680 = vdwg.mxu0
    %v681 = vadd.f32 %v605, %v678
    %v682 = vxor.u32 %v681, 2147483648
    %v683 = vmul.f32 %v682, 1.442695
    %v684 = vpow.pop %v683
    %v685 = vadd.f32 %v684, 1.0
    %v686 = vrcp.pop %v685
    %v687 = vmul.f32 1.0, %v686
    %v688 = vtanh.pop %v681
    %v689 = vmul.f32 %v687, %v593
    %691 = vrot.lane.b32.xlu0 %v688, 64
    %v692 = vpop.permute.xlu0 %691
    %v694 = vmul.f32 %v687, %v692
    %696 = vrot.lane.b32.xlu0 %v694, 32
    %v697 = vpop.permute.xlu0 %696
    %v699 = vadd.f32 %v689, %v697
    %v700 = vtanh.pop %v699
    %702 = vrot.lane.b32.xlu0 %v700, 64
    %v703 = vpop.permute.xlu0 %702
    %v705 = vmul.f32 %v687, %v703
    %706 = vset.pattern.permute.xlu0 6
    %707 = vperm.xlu0 %706, %v51
    %v708 = vpop.permute.xlu0 %707
    %v710 = vmul.f32 %v708, %v61
    %v711 = vadd.f32 %v710, %v68
    %713 = vrot.lane.b32.xlu0 %v705, 32
    %v714 = vpop.permute.xlu0 %713
    %v715 = vsel %vm77, %v714, 0
    %717 = vmatprep.subr.mxu0 0.0
    %718 = vmatpush1.msra.mxu0 0.0
    %719 = vmatprep.subr.mxu0 0.0
    %720 = vmatpush1.msra.mxu0 0.0
    %721 = vmatprep.subr.mxu0 0.0
    %722 = vmatpush1.msra.mxu0 0.0
    %723 = vmatprep.subr.mxu0 0.0
    %724 = vmatpush1.msra.mxu0 0.0
    %725 = vmatprep.subr.mxu0 0.0
    %726 = vmatpush1.msra.mxu0 0.0
    %727 = vmatprep.subr.mxu0 0.0
    %728 = vmatpush1.msra.mxu0 0.0
    %729 = vmatprep.subr.mxu0 0.0
    %730 = vmatpush1.msra.mxu0 0.0
    %731 = vmatprep.subr.mxu0 0.0
    %732 = vmatpush1.msra.mxu0 0.0
    %733 = vmatprep.subr.mxu0 0.0
    %734 = vmatpush1.msra.mxu0 0.0
    %735 = vmatprep.subr.mxu0 0.0
    %736 = vmatpush1.msra.mxu0 0.0
    %737 = vmatprep.subr.mxu0 0.0
    %738 = vmatpush1.msra.mxu0 0.0
    %739 = vmatprep.subr.mxu0 0.0
    %740 = vmatpush1.msra.mxu0 0.0
    %741 = vmatprep.subr.mxu0 0.0
    %742 = vmatpush1.msra.mxu0 %v55
    %743 = vmatprep.subr.mxu0 0.0
    %744 = vmatpush1.msra.mxu0 %v54
    %745 = vmatprep.subr.mxu0 0.0
    %746 = vmatpush1.msra.mxu0 %v53
    %747 = vmatprep.subr.mxu0 0.0
    %748 = vmatpush1.msra.mxu0 %v52
    %749 = vmatprep.subr.mxu0 0.0
    %750 = vmatpush2.msra.mxu0 0.0
    %751 = vmatprep.subr.mxu0 0.0
    %752 = vmatpush2.msra.mxu0 0.0
    %753 = vmatprep.subr.mxu0 0.0
    %754 = vmatpush2.msra.mxu0 0.0
    %755 = vmatprep.subr.mxu0 0.0
    %756 = vmatpush2.msra.mxu0 0.0
    %757 = vmatprep.subr.mxu0 0.0
    %758 = vmatpush2.msra.mxu0 0.0
    %759 = vmatprep.subr.mxu0 0.0
    %760 = vmatpush2.msra.mxu0 0.0
    %761 = vmatprep.subr.mxu0 0.0
    %762 = vmatpush2.msra.mxu0 0.0
    %763 = vmatprep.subr.mxu0 0.0
    %764 = vmatpush2.msra.mxu0 0.0
    %765 = vmatprep.subr.mxu0 0.0
    %766 = vmatpush2.msra.mxu0 0.0
    %767 = vmatprep.subr.mxu0 0.0
    %768 = vmatpush2.msra.mxu0 0.0
    %769 = vmatprep.subr.mxu0 0.0
    %770 = vmatpush2.msra.mxu0 0.0
    %771 = vmatprep.subr.mxu0 0.0
    %772 = vmatpush2.msra.mxu0 0.0
    %773 = vmatprep.subr.mxu0 0.0
    %774 = vmatpush2.msra.mxu0 0.0
    %775 = vmatprep.subr.mxu0 0.0
    %776 = vmatpush2.msra.mxu0 0.0
    %777 = vmatprep.subr.mxu0 0.0
    %778 = vmatpush2.msra.mxu0 0.0
    %779 = vmatprep.subr.mxu0 0.0
    %780 = vmatpush2.msra.mxu0 0.0
    %781 = vmatprep.mubr.f32.mxu0 0.0
    %782 = vmatmul.mubr.f32.gmra.mxu0 %v715
    %v783 = vpop.f32.mrf.mxu0
    %v784 = vadd.f32 0.0, %v783
    %v785 = vpop.f32.mrf.mxu0
    %786 = vdwg.mxu0
    %v787 = vadd.f32 %v711, %v784
    %v788 = vxor.u32 %v787, 2147483648
    %v789 = vmul.f32 %v788, 1.442695
    %v790 = vpow.pop %v789
    %v791 = vadd.f32 %v790, 1.0
    %v792 = vrcp.pop %v791
    %v793 = vmul.f32 1.0, %v792
    %v794 = vtanh.pop %v787
    %v795 = vmul.f32 %v793, %v699
    %797 = vrot.lane.b32.xlu0 %v794, 64
    %v798 = vpop.permute.xlu0 %797
    %v800 = vmul.f32 %v793, %v798
    %802 = vrot.lane.b32.xlu0 %v800, 32
    %v803 = vpop.permute.xlu0 %802
    %v805 = vadd.f32 %v795, %v803
    %v806 = vtanh.pop %v805
    %808 = vrot.lane.b32.xlu0 %v806, 64
    %v809 = vpop.permute.xlu0 %808
    %v811 = vmul.f32 %v793, %v809
    %812 = vset.pattern.permute.xlu0 7
    %813 = vperm.xlu0 %812, %v51
    %v814 = vpop.permute.xlu0 %813
    %v816 = vmul.f32 %v814, %v61
    %v817 = vadd.f32 %v816, %v68
    %819 = vrot.lane.b32.xlu0 %v811, 32
    %v820 = vpop.permute.xlu0 %819
    %v821 = vsel %vm77, %v820, 0
    %823 = vmatprep.subr.mxu0 0.0
    %824 = vmatpush1.msra.mxu0 0.0
    %825 = vmatprep.subr.mxu0 0.0
    %826 = vmatpush1.msra.mxu0 0.0
    %827 = vmatprep.subr.mxu0 0.0
    %828 = vmatpush1.msra.mxu0 0.0
    %829 = vmatprep.subr.mxu0 0.0
    %830 = vmatpush1.msra.mxu0 0.0
    %831 = vmatprep.subr.mxu0 0.0
    %832 = vmatpush1.msra.mxu0 0.0
    %833 = vmatprep.subr.mxu0 0.0
    %834 = vmatpush1.msra.mxu0 0.0
    %835 = vmatprep.subr.mxu0 0.0
    %836 = vmatpush1.msra.mxu0 0.0
    %837 = vmatprep.subr.mxu0 0.0
    %838 = vmatpush1.msra.mxu0 0.0
    %839 = vmatprep.subr.mxu0 0.0
    %840 = vmatpush1.msra.mxu0 0.0
    %841 = vmatprep.subr.mxu0 0.0
    %842 = vmatpush1.msra.mxu0 0.0
    %843 = vmatprep.subr.mxu0 0.0
    %844 = vmatpush1.msra.mxu0 0.0
    %845 = vmatprep.subr.mxu0 0.0
    %846 = vmatpush1.msra.mxu0 0.0
    %847 = vmatprep.subr.mxu0 0.0
    %848 = vmatpush1.msra.mxu0 %v55
    %849 = vmatprep.subr.mxu0 0.0
    %850 = vmatpush1.msra.mxu0 %v54
    %851 = vmatprep.subr.mxu0 0.0
    %852 = vmatpush1.msra.mxu0 %v53
    %853 = vmatprep.subr.mxu0 0.0
    %854 = vmatpush1.msra.mxu0 %v52
    %855 = vmatprep.subr.mxu0 0.0
    %856 = vmatpush2.msra.mxu0 0.0
    %857 = vmatprep.subr.mxu0 0.0
    %858 = vmatpush2.msra.mxu0 0.0
    %859 = vmatprep.subr.mxu0 0.0
    %860 = vmatpush2.msra.mxu0 0.0
    %861 = vmatprep.subr.mxu0 0.0
    %862 = vmatpush2.msra.mxu0 0.0
    %863 = vmatprep.subr.mxu0 0.0
    %864 = vmatpush2.msra.mxu0 0.0
    %865 = vmatprep.subr.mxu0 0.0
    %866 = vmatpush2.msra.mxu0 0.0
    %867 = vmatprep.subr.mxu0 0.0
    %868 = vmatpush2.msra.mxu0 0.0
    %869 = vmatprep.subr.mxu0 0.0
    %870 = vmatpush2.msra.mxu0 0.0
    %871 = vmatprep.subr.mxu0 0.0
    %872 = vmatpush2.msra.mxu0 0.0
    %873 = vmatprep.subr.mxu0 0.0
    %874 = vmatpush2.msra.mxu0 0.0
    %875 = vmatprep.subr.mxu0 0.0
    %876 = vmatpush2.msra.mxu0 0.0
    %877 = vmatprep.subr.mxu0 0.0
    %878 = vmatpush2.msra.mxu0 0.0
    %879 = vmatprep.subr.mxu0 0.0
    %880 = vmatpush2.msra.mxu0 0.0
    %881 = vmatprep.subr.mxu0 0.0
    %882 = vmatpush2.msra.mxu0 0.0
    %883 = vmatprep.subr.mxu0 0.0
    %884 = vmatpush2.msra.mxu0 0.0
    %885 = vmatprep.subr.mxu0 0.0
    %886 = vmatpush2.msra.mxu0 0.0
    %887 = vmatprep.mubr.f32.mxu0 0.0
    %888 = vmatmul.mubr.f32.gmra.mxu0 %v821
    %v889 = vpop.f32.mrf.mxu0
    %v890 = vadd.f32 0.0, %v889
    %v891 = vpop.f32.mrf.mxu0
    %892 = vdwg.mxu0
    %v893 = vadd.f32 %v817, %v890
    %v894 = vxor.u32 %v893, 2147483648
    %v895 = vmul.f32 %v894, 1.442695
    %v896 = vpow.pop %v895
    %v897 = vadd.f32 %v896, 1.0
    %v898 = vrcp.pop %v897
    %v899 = vmul.f32 1.0, %v898
    %v900 = vtanh.pop %v893
    %v901 = vmul.f32 %v899, %v805
    %903 = vrot.lane.b32.xlu0 %v900, 64
    %v904 = vpop.permute.xlu0 %903
    %v906 = vmul.f32 %v899, %v904
    %908 = vrot.lane.b32.xlu0 %v906, 32
    %v909 = vpop.permute.xlu0 %908
    %v911 = vadd.f32 %v901, %v909
    %v912 = vtanh.pop %v911
    %914 = vrot.lane.b32.xlu0 %v912, 64
    %v915 = vpop.permute.xlu0 %914
    %v917 = vmul.f32 %v899, %v915
    %v918 = vld [vmem:[%s4] sm:$0x1]
    %v920 = vlaneseq
    %v921 = vshrl.u32 %v920, 7
    %v922 = vsub.s32 0, %v921
    %v923 = vrot.slane %v918, %v922
    %924 = vrot.lane.b32.xlu0 %v923, 96
    %v925 = vpop.permute.xlu0 %924
    %v927 = vmul.f32 %v917, %v925
    %929 = vrot.lane.b32.xlu0 %v927, 32
    %v930 = vpop.permute.xlu0 %929
    %v932 = vsel %vm77, %v930, 0.0
    %933 = vadd.xlane.f32.xlu0 %v932
    %v934 = vpop.xlane.xlu0 %933
    %v935 = vld [vmem:[#allocation2] sm:$0x1]
    %v937 = vlaneseq
    %v938 = vshrl.u32 %v937, 7
    %v939 = vsub.s32 0, %v938
    %v940 = vrot.slane %v935, %v939
    %v942 = vadd.f32 %v934, %v940
    %vm943 = vcmask 7168
    %944 = vst.msk [vmem:[%s6] sm:$0xff] %vm943, %v942
    // Predicated region
    $region34: #{lstm_forward_batched.1} parent=1 // pred_check
      _
    $region35: #{lstm_forward_batched.1} parent=1 // pred_check_branch
      %946 = sbr.rel (0) target = $region37
    $region36: #{lstm_forward_batched.1} parent=1 // pred_region
      _
    $region37: #{lstm_forward_batched.1} parent=1 // pred_fallthru
      _
    // Predicated region
    $region38: #{lstm_forward_batched.1} parent=1 // pred_check
      _
    $region39: #{lstm_forward_batched.1} parent=1 // pred_check_branch
      %948 = sbr.rel (0) target = $region41
    $region40: #{lstm_forward_batched.1} parent=1 // pred_region
      _
    $region41: #{lstm_forward_batched.1} parent=1 // pred_fallthru
      _
    %949 = vsyncpa [#allocation4], 1
    %950 = vsyncpa [#allocation6], 1

</llo_original>
